<compile_context>
chip_gen: v6e
topology: v6e:2x2x1
jax: 0.10.0
libtpu: 0.0.40
codegen_flags: <defaults>
</compile_context>

<pallas_src>
import functools
import math

import jax
import jax.numpy as jnp
from jax.experimental import pallas as pl
from jax.experimental.pallas import tpu as pltpu


# ----------------------------------------------------------------------------
# config (small, consistent with the module's __init__)
# ----------------------------------------------------------------------------
CFG = dict(
    history_num_frames=4,
    route_point_num=8,
    future_num_frames=6,
    output_gaussian=True,       # parameterize_gmm path
    global_num_layers=2,
    vae_layer_num=2,
    latent_dim=8,
    learner_w=1.0,              # != 0 so encoder/decoder exist
    ori_std=0.1,
    hidden_dim=64,              # GraphNet hidden width
)

H = CFG["history_num_frames"]
R = CFG["route_point_num"]
T = H + 4 + R                                  # 16 points per agent
AGENT_FEAT_DIM = 3 * T                         # 48
ROUTE_DIM = H + R                              # 12
LATENT = CFG["latent_dim"]                     # 8
FUT = CFG["future_num_frames"]                 # 6
ACT_DIM = 5                                    # output_gaussian == True
HIDDEN = CFG["hidden_dim"]                     # 64
ORI_STD = CFG["ori_std"]
CTX_DIM = (T - H) * 2 + T                      # 24 + 16 = 40 (decoder side-in)
ENC_OUT = 2 * LATENT                           # 16
DEC_OUT = H * 5                                # 20
POL_OUT = ACT_DIM * FUT                        # 30
FUSED_OUT = DEC_OUT + 1                        # dec params + per-row KL

MAX_BM = 2048                                  # row-tile cap (rows are tiny)


def _round_up(x, m):
    return -(-x // m) * m


# ----------------------------------------------------------------------------
# Pallas kernels
# ----------------------------------------------------------------------------
def vae_fused_kernel(x_ref, eps_ref,
                     w1a_ref, b1a_ref, w2e_ref, b2e_ref,
                     wz_ref, w2d_ref, b2d_ref, out_ref):
    """Fused: [enc-L1 | dec-ctx-L1] -> enc-L2 -> reparam -> dec-L1(z) -> dec-L2.

    bf16 operands into the MXU, f32 accumulation, f32 epilogue (v5e-safe).
    Output slab: [:, :DEC_OUT] = decoder params, [:, DEC_OUT] = per-row KL sum.
    """
    # ---- shared first layer: x @ [Wenc1 | Wdec_ctx_expanded] (48 x 128) ----
    h_all = jnp.dot(x_ref[...], w1a_ref[...],
                    preferred_element_type=jnp.float32) + b1a_ref[...]
    h_enc = jnp.maximum(h_all[:, :HIDDEN], 0.0)      # encoder hidden
    ctx_pre = h_all[:, HIDDEN:]                      # decoder L1 ctx part + bd1

    # ---- encoder L2 ----
    enc = jnp.dot(h_enc.astype(jnp.bfloat16), w2e_ref[...],
                  preferred_element_type=jnp.float32) + b2e_ref[...]
    mu = enc[:, :LATENT]
    logvar = enc[:, LATENT:]

    # ---- reparameterization (VPU/EUP, f32) ----
    z = mu + eps_ref[...].astype(jnp.float32) * jnp.exp(0.5 * logvar)

    # ---- decoder L1 (z part) + L2 ----
    hd = jnp.maximum(jnp.dot(z.astype(jnp.bfloat16), wz_ref[...],
                             preferred_element_type=jnp.float32) + ctx_pre, 0.0)
    dec = jnp.dot(hd.astype(jnp.bfloat16), w2d_ref[...],
                  preferred_element_type=jnp.float32) + b2d_ref[...]

    # ---- per-row KL (exp on the otherwise-idle EUP slot) ----
    kl = 0.5 * jnp.sum(jnp.exp(logvar) + mu * mu - logvar - 1.0,
                       axis=-1, keepdims=True)

    out_ref[...] = jnp.concatenate([dec, kl], axis=-1)


def mlp2_kernel(x_ref, w1_ref, b1_ref, w2_ref, b2_ref, o_ref):
    """Policy GraphNet: y = relu(x @ W1 + b1) @ W2 + b2 (bf16 in, f32 out)."""
    h = jnp.maximum(jnp.dot(x_ref[...], w1_ref[...],
                            preferred_element_type=jnp.float32) + b1_ref[...],
                    0.0)
    o_ref[...] = (jnp.dot(h.astype(jnp.bfloat16), w2_ref[...],
                          preferred_element_type=jnp.float32) + b2_ref[...])


# ----------------------------------------------------------------------------
# wrappers (row-only padding, full-array lane blocks, M tiled "parallel")
# ----------------------------------------------------------------------------
def _row_tiling(n):
    """Pick (row_tile, padded_rows): big tiles (HBM roofline), >=2 tiles when
    the agent count is large enough to feed both v7x TensorCores."""
    n8 = _round_up(max(n, 8), 8)
    g = pl.cdiv(n8, MAX_BM)
    if n8 >= 256:
        g = max(g, 2)
    bm = _round_up(pl.cdiv(n8, g), 8)
    return bm, bm * g


def _pad_rows(x, np_):
    n = x.shape[0]
    return x if n == np_ else jnp.pad(x, ((0, np_ - n), (0, 0)))


def _tiled_spec(bm, cols):
    return pl.BlockSpec((bm, cols), lambda i: (i, 0))


def _bcast_spec(shape):
    return pl.BlockSpec(shape, lambda i: (0,) * len(shape))


def vae_fused_pallas(p, x, eps):
    n = x.shape[0]
    bm, np_ = _row_tiling(n)
    x = _pad_rows(x.astype(jnp.bfloat16), np_)
    eps = _pad_rows(eps.astype(jnp.bfloat16), np_)
    out = pl.pallas_call(
        vae_fused_kernel,
        out_shape=jax.ShapeDtypeStruct((np_, FUSED_OUT), jnp.float32),
        grid=(np_ // bm,),
        in_specs=[
            _tiled_spec(bm, AGENT_FEAT_DIM),
            _tiled_spec(bm, LATENT),
            _bcast_spec(p["w1a"].shape), _bcast_spec(p["b1a"].shape),
            _bcast_spec(p["w2e"].shape), _bcast_spec(p["b2e"].shape),
            _bcast_spec(p["wz"].shape),
            _bcast_spec(p["w2d"].shape), _bcast_spec(p["b2d"].shape),
        ],
        out_specs=_tiled_spec(bm, FUSED_OUT),
        compiler_params=pltpu.CompilerParams(
            dimension_semantics=("parallel",)),
    )(x, eps, p["w1a"], p["b1a"], p["w2e"], p["b2e"],
      p["wz"], p["w2d"], p["b2d"])
    rec_param = out[:n, :DEC_OUT]
    kl_rows = out[:n, DEC_OUT]          # padded rows sliced off before reduce
    return rec_param, kl_rows


def policy_pallas(p, x, node_pos=None, rotate=None, rel_relation=None):
    # TODO(synk): the real GraphNet message passing is not defined in the
    #             reference source; node_pos/rotate are accepted but unused.
    n = x.shape[0]
    bm, np_ = _row_tiling(n)
    x = _pad_rows(x.astype(jnp.bfloat16), np_)
    out = pl.pallas_call(
        mlp2_kernel,
        out_shape=jax.ShapeDtypeStruct((np_, POL_OUT), jnp.float32),
        grid=(np_ // bm,),
        in_specs=[
            _tiled_spec(bm, AGENT_FEAT_DIM),
            _bcast_spec(p["w1"].shape), _bcast_spec(p["b1"].shape),
            _bcast_spec(p["w2"].shape), _bcast_spec(p["b2"].shape),
        ],
        out_specs=_tiled_spec(bm, POL_OUT),
        compiler_params=pltpu.CompilerParams(
            dimension_semantics=("parallel",)),
    )(x, p["w1"], p["b1"], p["w2"], p["b2"])
    return out[:n], rel_relation


# ----------------------------------------------------------------------------
# params (weights packed once at init; MXU operands stored bf16, biases f32)
# ----------------------------------------------------------------------------
def init_params(key):
    ks = jax.random.split(key, 6)

    def dense(k, din, dout):
        return jax.random.normal(k, (din, dout), jnp.float32) / math.sqrt(din)

    enc_w1 = dense(ks[0], AGENT_FEAT_DIM, HIDDEN)
    enc_b1 = jnp.zeros((1, HIDDEN), jnp.float32)
    enc_w2 = dense(ks[1], HIDDEN, ENC_OUT)
    enc_b2 = jnp.zeros((1, ENC_OUT), jnp.float32)
    dec_w1 = dense(ks[2], LATENT + CTX_DIM, HIDDEN)     # input = [z|ctx|attr]
    dec_b1 = jnp.zeros((1, HIDDEN), jnp.float32)
    dec_w2 = dense(ks[3], HIDDEN, DEC_OUT)
    dec_b2 = jnp.zeros((1, DEC_OUT), jnp.float32)
    pol_w1 = dense(ks[4], AGENT_FEAT_DIM, HIDDEN)
    pol_b1 = jnp.zeros((1, HIDDEN), jnp.float32)
    pol_w2 = dense(ks[5], HIDDEN, POL_OUT)
    pol_b2 = jnp.zeros((1, POL_OUT), jnp.float32)

    # Split decoder L1: z-part stays separate; ctx/attr rows are scattered to
    # the graph_state columns they correspond to (ori-hist xy columns stay 0),
    # so the decoder's ctx contribution becomes x @ Wctx_expanded.
    wz = dec_w1[:LATENT]                                 # (8, 64)
    wctx = dec_w1[LATENT:]                               # (40, 64)
    ctx_cols = ([3 * t + c for t in range(H, T) for c in (0, 1)]
                + [3 * t + 2 for t in range(T)])         # 24 + 16 = 40 cols
    wctx_exp = (jnp.zeros((AGENT_FEAT_DIM, HIDDEN), jnp.float32)
                .at[jnp.array(ctx_cols)].set(wctx))

    w1a = jnp.concatenate([enc_w1, wctx_exp], axis=1)    # (48, 128)
    b1a = jnp.concatenate([enc_b1, dec_b1], axis=1)      # (1, 128)

    return dict(
        vae=dict(w1a=w1a.astype(jnp.bfloat16), b1a=b1a,
                 w2e=enc_w2.astype(jnp.bfloat16), b2e=enc_b2,
                 wz=wz.astype(jnp.bfloat16),
                 w2d=dec_w2.astype(jnp.bfloat16), b2d=dec_b2),
        policy=dict(w1=pol_w1.astype(jnp.bfloat16), b1=pol_b1,
                    w2=pol_w2.astype(jnp.bfloat16), b2=pol_b2),
    )


# ----------------------------------------------------------------------------
# VAE_Model forward (JAX glue around the two Pallas launches)
# ----------------------------------------------------------------------------
def _gaussian_params(param):
    """param: (N, H, 5) -> mean, tril diag a,b (exp), off-diag c, log det."""
    mean = param[..., :2]
    c = param[..., 2]                       # tril[1,0]
    a = jnp.exp(param[..., 3])              # tril[0,0]
    b = jnp.exp(param[..., 4])              # tril[1,1]
    logdet = param[..., 3] + param[..., 4]  # log det(scale_tril)
    return mean, a, b, c, logdet


def vae_rec_hist(params, graph_state, key):
    n = graph_state.shape[0]
    state_reshape = graph_state.reshape(n, T, 3)
    ori_rel_state = state_reshape[:, :, :2]
    state_attr = state_reshape[:, :, 2]
    ori_hist = ori_rel_state[:, :H]                       # (N, H, 2)
    context_state = ori_rel_state[:, H:]                  # (N, T-H, 2)

    epsilon = jax.random.normal(key, (n, LATENT), jnp.float32)

    # fused encoder + reparam + decoder + per-row KL (single pallas_call)
    rec_param, kl_rows = vae_fused_pallas(params["vae"], graph_state, epsilon)
    kl_loss = jnp.mean(kl_rows)

    rec_param = rec_param.reshape(n, H, 5)
    mean, a, b, c, logdet = _gaussian_params(rec_param)

    # MultivariateNormal(loc=mean, scale_tril=[[a,0],[c,b]]).log_prob(ori_hist)
    # TODO(synk): Gaussian log-prob epilogue could also be fused in-kernel at
    #             production agent counts; kept in XLA for clarity.
    dx = ori_hist - mean
    y0 = dx[..., 0] / a
    y1 = (dx[..., 1] - c * y0) / b
    log_prob = -0.5 * (y0 ** 2 + y1 ** 2) - logdet - jnp.log(2.0 * jnp.pi)
    neg_logp = -log_prob                                   # (N, H)

    hist_mask = state_attr[:, :H] != 0.0
    cnt = jnp.maximum(jnp.sum(hist_mask), 1)
    rec_loss = jnp.sum(jnp.where(hist_mask, neg_logp, 0.0)) / cnt

    dist = dict(mean=mean, a=a, b=b, c=c)
    return (rec_loss, kl_loss), dist, state_attr, hist_mask, context_state


def get_rotate(goal_pos, ori_pos):
    rel = goal_pos - ori_pos
    yaw = jnp.arctan2(rel[:, 1], rel[:, 0])
    cos, sin = jnp.cos(yaw), jnp.sin(yaw)
    r1 = jnp.stack([cos, -sin], axis=1)
    r2 = jnp.stack([sin, cos], axis=1)
    return jnp.stack([r1, r2], axis=1)


def get_rec_state(dist, state_attr, hist_mask, context_state, node_pos,
                  ori_pos, rotate, key):
    n = state_attr.shape[0]
    k_samp, k_noise = jax.random.split(key)

    # sample from MVN: x = mean + L @ eps, L = [[a,0],[c,b]]
    eps = jax.random.normal(k_samp, (n, H, 2), jnp.float32)
    s0 = dist["mean"][..., 0] + dist["a"] * eps[..., 0]
    s1 = dist["mean"][..., 1] + dist["c"] * eps[..., 0] + dist["b"] * eps[..., 1]
    expert_rec_hist = (jnp.stack([s0, s1], axis=-1)
                       * hist_mask[:, :, None].astype(jnp.float32))

    rel_state = jnp.concatenate([expert_rec_hist, context_state], axis=1)
    rec_attr = state_attr

    noise = ORI_STD * jax.random.normal(k_noise, (n, 2), jnp.float32)
    cur = rel_state[:, 0] + noise

    route_point_pos = context_state[:, :R]                 # (N, R, 2)
    route_width = state_attr[:, H:ROUTE_DIM]               # (N, R)
    route_avail = (route_width != 0.0).astype(jnp.float32)
    routing_dist = (jnp.linalg.norm(route_point_pos - cur[:, None], axis=-1)
                    - route_width - route_avail * 1000.0)
    sort_idx = jnp.argsort(routing_dist, axis=-1)
    sorted_pos = jnp.take_along_axis(route_point_pos, sort_idx[..., None], axis=1)
    sorted_width = jnp.take_along_axis(route_width, sort_idx, axis=1)
    rel_state = rel_state.at[:, H:ROUTE_DIM].set(sorted_pos)
    rec_attr = rec_attr.at[:, H:ROUTE_DIM].set(sorted_width)

    abs_state = jnp.einsum("nta,nba->ntb", rel_state, rotate) + ori_pos[:, None]
    noise_abs = jnp.einsum("na,nba->nb", noise, rotate)
    abs_goal = abs_state[:, -1]
    rec_ori_pos = abs_state[:, 0] + noise_abs
    rec_rotate = get_rotate(abs_goal, rec_ori_pos)

    rec_rel_state = jnp.einsum("nta,nab->ntb",
                               abs_state - rec_ori_pos[:, None], rec_rotate)
    state_mask = (rec_attr[:, :ROUTE_DIM, None] != 0.0).astype(jnp.float32)
    rec_rel_state = rec_rel_state.at[:, :ROUTE_DIM].set(
        rec_rel_state[:, :ROUTE_DIM] * state_mask)

    rec_node_pos = node_pos + rec_ori_pos - ori_pos
    # NOTE: matches the reference -- the original state_attr channel is used.
    rec_graph_state = jnp.concatenate(
        [rec_rel_state, state_attr[:, :, None]], axis=-1).reshape(n, -1)
    return rec_graph_state, rec_node_pos, rec_ori_pos, rec_rotate


def vae_model_forward(params, graph_state, node_pos, ori_pos, rotate, key):
    k1, k2 = jax.random.split(key)
    vae_loss, dist, state_attr, hist_mask, context_state = vae_rec_hist(
        params, graph_state, k1)
    (rec_graph_state, rec_node_pos, rec_ori_pos,
     rec_rotate) = get_rec_state(dist, state_attr, hist_mask, context_state,
                                 node_pos, ori_pos, rotate, k2)
    action_preds, _ = policy_pallas(
        params["policy"], rec_graph_state, rec_node_pos, rec_rotate)
    return action_preds, vae_loss, rec_ori_pos, rec_rotate


# ----------------------------------------------------------------------------
# main
# ----------------------------------------------------------------------------
if __name__ == "__main__":
    root = jax.random.PRNGKey(0)
    k_param, k_xy, k_attr, k_pos, k_rot, k_fwd = jax.random.split(root, 6)

    N_AGENTS = 6
    params = init_params(k_param)

    # build graph_state = interleaved (x, y, attr) per point, flattened
    xy = jax.random.normal(k_xy, (N_AGENTS, T, 2), jnp.float32) * 5.0
    attr = jnp.abs(jax.random.normal(k_attr, (N_AGENTS, T), jnp.float32))
    # zero-out a route attr so masks exercise both branches (keep hist nonzero)
    attr = attr.at[:, H + 2].set(0.0)
    graph_state = jnp.concatenate([xy, attr[..., None]], axis=-1).reshape(
        N_AGENTS, -1)                                       # (6, 48)

    node_pos = jax.random.normal(k_pos, (N_AGENTS, 2), jnp.float32) * 10.0
    ori_pos = jax.random.normal(jax.random.fold_in(k_pos, 1),
                                (N_AGENTS, 2), jnp.float32) * 10.0
    yaw = jax.random.uniform(k_rot, (N_AGENTS,), jnp.float32,
                             -jnp.pi, jnp.pi)
    rotate = jnp.stack(
        [jnp.stack([jnp.cos(yaw), -jnp.sin(yaw)], 1),
         jnp.stack([jnp.sin(yaw), jnp.cos(yaw)], 1)], axis=1)  # (6, 2, 2)

    fwd = jax.jit(functools.partial(vae_model_forward, params))
    action_preds, (rec_loss, kl_loss), rec_ori_pos, rec_rotate = fwd(
        graph_state, node_pos, ori_pos, rotate, k_fwd)

    jax.block_until_ready(
        (action_preds, rec_loss, kl_loss, rec_ori_pos, rec_rotate))
    assert action_preds.shape == (N_AGENTS, ACT_DIM * FUT)
    assert rec_ori_pos.shape == (N_AGENTS, 2)
    assert rec_rotate.shape == (N_AGENTS, 2, 2)
    assert jnp.all(jnp.isfinite(action_preds))
    assert jnp.isfinite(rec_loss) and jnp.isfinite(kl_loss)
    print("KERNEL_OK")
</pallas_src>

<mosaic_0001>
module attributes {stable_mosaic.version = 11 : i64} {
  func.func @vae_fused_kernel(%arg0: i32, %arg1: memref<8x48xbf16, #tpu.memory_space<vmem>>, %arg2: memref<8x8xbf16, #tpu.memory_space<vmem>>, %arg3: memref<48x128xbf16, #tpu.memory_space<vmem>>, %arg4: memref<1x128xf32, #tpu.memory_space<vmem>>, %arg5: memref<64x16xbf16, #tpu.memory_space<vmem>>, %arg6: memref<1x16xf32, #tpu.memory_space<vmem>>, %arg7: memref<8x64xbf16, #tpu.memory_space<vmem>>, %arg8: memref<64x20xbf16, #tpu.memory_space<vmem>>, %arg9: memref<1x20xf32, #tpu.memory_space<vmem>>, %arg10: memref<8x21xf32, #tpu.memory_space<vmem>>) attributes {dimension_semantics = [#tpu.dimension_semantics<parallel>], iteration_bounds = array<i64: 1>, scalar_prefetch = 0 : i64, scratch_operands = 0 : i64, tpu.core_type = #tpu.core_type<tc>, window_params = [{transform_indices = @transform_0, window_bounds = array<i64: 8, 48>}, {transform_indices = @transform_1, window_bounds = array<i64: 8, 8>}, {pipeline_mode = #tpu.pipeline_mode<synchronous>, transform_indices = @transform_2, window_bounds = array<i64: 48, 128>}, {pipeline_mode = #tpu.pipeline_mode<synchronous>, transform_indices = @transform_3, window_bounds = array<i64: 1, 128>}, {pipeline_mode = #tpu.pipeline_mode<synchronous>, transform_indices = @transform_4, window_bounds = array<i64: 64, 16>}, {pipeline_mode = #tpu.pipeline_mode<synchronous>, transform_indices = @transform_5, window_bounds = array<i64: 1, 16>}, {pipeline_mode = #tpu.pipeline_mode<synchronous>, transform_indices = @transform_6, window_bounds = array<i64: 8, 64>}, {pipeline_mode = #tpu.pipeline_mode<synchronous>, transform_indices = @transform_7, window_bounds = array<i64: 64, 20>}, {pipeline_mode = #tpu.pipeline_mode<synchronous>, transform_indices = @transform_8, window_bounds = array<i64: 1, 20>}, {transform_indices = @transform_9, window_bounds = array<i64: 8, 21>}]} {
    %c0 = arith.constant 0 : index
    %c0_0 = arith.constant 0 : index
    %0 = vector.load %arg1[%c0, %c0_0] : memref<8x48xbf16, #tpu.memory_space<vmem>>, vector<8x48xbf16>
    %c0_1 = arith.constant 0 : index
    %c0_2 = arith.constant 0 : index
    %1 = vector.load %arg3[%c0_1, %c0_2] : memref<48x128xbf16, #tpu.memory_space<vmem>>, vector<48x128xbf16>
    %cst = arith.constant dense<0.000000e+00> : vector<8x128xf32>
    %2 = tpu.matmul %0, %1, %cst {dimension_numbers = #tpu.dot_dimension_numbers<[1], [0], [0], [1], [0, 0, 1, 1], [], []>} : vector<8x48xbf16>, vector<48x128xbf16>, vector<8x128xf32> -> vector<8x128xf32>
    %c0_3 = arith.constant 0 : index
    %c0_4 = arith.constant 0 : index
    %3 = vector.load %arg4[%c0_3, %c0_4] : memref<1x128xf32, #tpu.memory_space<vmem>>, vector<1x128xf32>
    %4 = vector.broadcast %3 : vector<1x128xf32> to vector<8x128xf32>
    %5 = arith.addf %2, %4 : vector<8x128xf32>
    %6 = vector.extract_strided_slice %5 {offsets = [0, 0], sizes = [8, 64], strides = [1, 1]} : vector<8x128xf32> to vector<8x64xf32>
    %cst_5 = arith.constant 0.000000e+00 : f32
    %7 = vector.broadcast %cst_5 : f32 to vector<8x64xf32>
    %8 = arith.maximumf %6, %7 : vector<8x64xf32>
    %9 = vector.extract_strided_slice %5 {offsets = [0, 64], sizes = [8, 64], strides = [1, 1]} : vector<8x128xf32> to vector<8x64xf32>
    %10 = arith.truncf %8 : vector<8x64xf32> to vector<8x64xbf16>
    %c0_6 = arith.constant 0 : index
    %c0_7 = arith.constant 0 : index
    %11 = vector.load %arg5[%c0_6, %c0_7] : memref<64x16xbf16, #tpu.memory_space<vmem>>, vector<64x16xbf16>
    %cst_8 = arith.constant dense<0.000000e+00> : vector<8x16xf32>
    %12 = tpu.matmul %10, %11, %cst_8 {dimension_numbers = #tpu.dot_dimension_numbers<[1], [0], [0], [1], [0, 0, 1, 1], [], []>} : vector<8x64xbf16>, vector<64x16xbf16>, vector<8x16xf32> -> vector<8x16xf32>
    %c0_9 = arith.constant 0 : index
    %c0_10 = arith.constant 0 : index
    %13 = vector.load %arg6[%c0_9, %c0_10] : memref<1x16xf32, #tpu.memory_space<vmem>>, vector<1x16xf32>
    %14 = vector.broadcast %13 : vector<1x16xf32> to vector<8x16xf32>
    %15 = arith.addf %12, %14 : vector<8x16xf32>
    %16 = vector.extract_strided_slice %15 {offsets = [0, 0], sizes = [8, 8], strides = [1, 1]} : vector<8x16xf32> to vector<8x8xf32>
    %17 = vector.extract_strided_slice %15 {offsets = [0, 8], sizes = [8, 8], strides = [1, 1]} : vector<8x16xf32> to vector<8x8xf32>
    %c0_11 = arith.constant 0 : index
    %c0_12 = arith.constant 0 : index
    %18 = vector.load %arg2[%c0_11, %c0_12] : memref<8x8xbf16, #tpu.memory_space<vmem>>, vector<8x8xbf16>
    %19 = arith.extf %18 : vector<8x8xbf16> to vector<8x8xf32>
    %cst_13 = arith.constant 5.000000e-01 : f32
    %20 = vector.broadcast %cst_13 : f32 to vector<8x8xf32>
    %21 = arith.mulf %20, %17 : vector<8x8xf32>
    %22 = math.exp %21 : vector<8x8xf32>
    %23 = arith.mulf %19, %22 : vector<8x8xf32>
    %24 = arith.addf %16, %23 : vector<8x8xf32>
    %25 = arith.truncf %24 : vector<8x8xf32> to vector<8x8xbf16>
    %c0_14 = arith.constant 0 : index
    %c0_15 = arith.constant 0 : index
    %26 = vector.load %arg7[%c0_14, %c0_15] : memref<8x64xbf16, #tpu.memory_space<vmem>>, vector<8x64xbf16>
    %cst_16 = arith.constant dense<0.000000e+00> : vector<8x64xf32>
    %27 = tpu.matmul %25, %26, %cst_16 {dimension_numbers = #tpu.dot_dimension_numbers<[1], [0], [0], [1], [0, 0, 1, 1], [], []>} : vector<8x8xbf16>, vector<8x64xbf16>, vector<8x64xf32> -> vector<8x64xf32>
    %28 = arith.addf %27, %9 : vector<8x64xf32>
    %cst_17 = arith.constant 0.000000e+00 : f32
    %29 = vector.broadcast %cst_17 : f32 to vector<8x64xf32>
    %30 = arith.maximumf %28, %29 : vector<8x64xf32>
    %31 = arith.truncf %30 : vector<8x64xf32> to vector<8x64xbf16>
    %c0_18 = arith.constant 0 : index
    %c0_19 = arith.constant 0 : index
    %32 = vector.load %arg8[%c0_18, %c0_19] : memref<64x20xbf16, #tpu.memory_space<vmem>>, vector<64x20xbf16>
    %cst_20 = arith.constant dense<0.000000e+00> : vector<8x20xf32>
    %33 = tpu.matmul %31, %32, %cst_20 {dimension_numbers = #tpu.dot_dimension_numbers<[1], [0], [0], [1], [0, 0, 1, 1], [], []>} : vector<8x64xbf16>, vector<64x20xbf16>, vector<8x20xf32> -> vector<8x20xf32>
    %c0_21 = arith.constant 0 : index
    %c0_22 = arith.constant 0 : index
    %34 = vector.load %arg9[%c0_21, %c0_22] : memref<1x20xf32, #tpu.memory_space<vmem>>, vector<1x20xf32>
    %35 = vector.broadcast %34 : vector<1x20xf32> to vector<8x20xf32>
    %36 = arith.addf %33, %35 : vector<8x20xf32>
    %37 = math.exp %17 : vector<8x8xf32>
    %38 = arith.mulf %16, %16 : vector<8x8xf32>
    %39 = arith.addf %37, %38 : vector<8x8xf32>
    %40 = arith.subf %39, %17 : vector<8x8xf32>
    %cst_23 = arith.constant 1.000000e+00 : f32
    %41 = vector.broadcast %cst_23 : f32 to vector<8x8xf32>
    %42 = arith.subf %40, %41 : vector<8x8xf32>
    %cst_24 = arith.constant dense<0.000000e+00> : vector<8xf32>
    %43 = vector.multi_reduction <add>, %42, %cst_24 [1] : vector<8x8xf32> to vector<8xf32>
    %44 = vector.shape_cast %43 : vector<8xf32> to vector<8x1xf32>
    %cst_25 = arith.constant 5.000000e-01 : f32
    %45 = vector.broadcast %cst_25 : f32 to vector<8x1xf32>
    %46 = arith.mulf %45, %44 : vector<8x1xf32>
    %47 = tpu.concatenate %36, %46 in 1 : vector<8x20xf32>, vector<8x1xf32> -> vector<8x21xf32>
    %c0_26 = arith.constant 0 : index
    %c0_27 = arith.constant 0 : index
    %48 = vector.load %arg10[%c0_26, %c0_27] : memref<8x21xf32, #tpu.memory_space<vmem>>, vector<8x21xf32>
    tpu.vector_store %arg10[%c0_26, %c0_27], %47 {strides = array<i32>} : memref<8x21xf32, #tpu.memory_space<vmem>>, vector<8x21xf32>,
    return
  }
  func.func @transform_0(%arg0: i32) -> (i32, i32) {
    %c0_i32 = arith.constant 0 : i32
    %c0_i32_0 = arith.constant 0 : i32
    return %arg0, %c0_i32 : i32, i32
  }
  func.func @transform_1(%arg0: i32) -> (i32, i32) {
    %c0_i32 = arith.constant 0 : i32
    %c0_i32_0 = arith.constant 0 : i32
    return %arg0, %c0_i32 : i32, i32
  }
  func.func @transform_2(%arg0: i32) -> (i32, i32) {
    %c0_i32 = arith.constant 0 : i32
    %c0_i32_0 = arith.constant 0 : i32
    %c0_i32_1 = arith.constant 0 : i32
    return %c0_i32, %c0_i32_0 : i32, i32
  }
  func.func @transform_3(%arg0: i32) -> (i32, i32) {
    %c0_i32 = arith.constant 0 : i32
    %c0_i32_0 = arith.constant 0 : i32
    %c0_i32_1 = arith.constant 0 : i32
    return %c0_i32, %c0_i32_0 : i32, i32
  }
  func.func @transform_4(%arg0: i32) -> (i32, i32) {
    %c0_i32 = arith.constant 0 : i32
    %c0_i32_0 = arith.constant 0 : i32
    %c0_i32_1 = arith.constant 0 : i32
    return %c0_i32, %c0_i32_0 : i32, i32
  }
  func.func @transform_5(%arg0: i32) -> (i32, i32) {
    %c0_i32 = arith.constant 0 : i32
    %c0_i32_0 = arith.constant 0 : i32
    %c0_i32_1 = arith.constant 0 : i32
    return %c0_i32, %c0_i32_0 : i32, i32
  }
  func.func @transform_6(%arg0: i32) -> (i32, i32) {
    %c0_i32 = arith.constant 0 : i32
    %c0_i32_0 = arith.constant 0 : i32
    %c0_i32_1 = arith.constant 0 : i32
    return %c0_i32, %c0_i32_0 : i32, i32
  }
  func.func @transform_7(%arg0: i32) -> (i32, i32) {
    %c0_i32 = arith.constant 0 : i32
    %c0_i32_0 = arith.constant 0 : i32
    %c0_i32_1 = arith.constant 0 : i32
    return %c0_i32, %c0_i32_0 : i32, i32
  }
  func.func @transform_8(%arg0: i32) -> (i32, i32) {
    %c0_i32 = arith.constant 0 : i32
    %c0_i32_0 = arith.constant 0 : i32
    %c0_i32_1 = arith.constant 0 : i32
    return %c0_i32, %c0_i32_0 : i32, i32
  }
  func.func @transform_9(%arg0: i32) -> (i32, i32) {
    %c0_i32 = arith.constant 0 : i32
    %c0_i32_0 = arith.constant 0 : i32
    return %arg0, %c0_i32 : i32, i32
  }
}

module attributes {stable_mosaic.version = 11 : i64} {
  func.func @mlp2_kernel(%arg0: i32, %arg1: memref<8x48xbf16, #tpu.memory_space<vmem>>, %arg2: memref<48x64xbf16, #tpu.memory_space<vmem>>, %arg3: memref<1x64xf32, #tpu.memory_space<vmem>>, %arg4: memref<64x30xbf16, #tpu.memory_space<vmem>>, %arg5: memref<1x30xf32, #tpu.memory_space<vmem>>, %arg6: memref<8x30xf32, #tpu.memory_space<vmem>>) attributes {dimension_semantics = [#tpu.dimension_semantics<parallel>], iteration_bounds = array<i64: 1>, scalar_prefetch = 0 : i64, scratch_operands = 0 : i64, tpu.core_type = #tpu.core_type<tc>, window_params = [{transform_indices = @transform_0, window_bounds = array<i64: 8, 48>}, {pipeline_mode = #tpu.pipeline_mode<synchronous>, transform_indices = @transform_1, window_bounds = array<i64: 48, 64>}, {pipeline_mode = #tpu.pipeline_mode<synchronous>, transform_indices = @transform_2, window_bounds = array<i64: 1, 64>}, {pipeline_mode = #tpu.pipeline_mode<synchronous>, transform_indices = @transform_3, window_bounds = array<i64: 64, 30>}, {pipeline_mode = #tpu.pipeline_mode<synchronous>, transform_indices = @transform_4, window_bounds = array<i64: 1, 30>}, {transform_indices = @transform_5, window_bounds = array<i64: 8, 30>}]} {
    %c0 = arith.constant 0 : index
    %c0_0 = arith.constant 0 : index
    %0 = vector.load %arg1[%c0, %c0_0] : memref<8x48xbf16, #tpu.memory_space<vmem>>, vector<8x48xbf16>
    %c0_1 = arith.constant 0 : index
    %c0_2 = arith.constant 0 : index
    %1 = vector.load %arg2[%c0_1, %c0_2] : memref<48x64xbf16, #tpu.memory_space<vmem>>, vector<48x64xbf16>
    %cst = arith.constant dense<0.000000e+00> : vector<8x64xf32>
    %2 = tpu.matmul %0, %1, %cst {dimension_numbers = #tpu.dot_dimension_numbers<[1], [0], [0], [1], [0, 0, 1, 1], [], []>} : vector<8x48xbf16>, vector<48x64xbf16>, vector<8x64xf32> -> vector<8x64xf32>
    %c0_3 = arith.constant 0 : index
    %c0_4 = arith.constant 0 : index
    %3 = vector.load %arg3[%c0_3, %c0_4] : memref<1x64xf32, #tpu.memory_space<vmem>>, vector<1x64xf32>
    %4 = vector.broadcast %3 : vector<1x64xf32> to vector<8x64xf32>
    %5 = arith.addf %2, %4 : vector<8x64xf32>
    %cst_5 = arith.constant 0.000000e+00 : f32
    %6 = vector.broadcast %cst_5 : f32 to vector<8x64xf32>
    %7 = arith.maximumf %5, %6 : vector<8x64xf32>
    %8 = arith.truncf %7 : vector<8x64xf32> to vector<8x64xbf16>
    %c0_6 = arith.constant 0 : index
    %c0_7 = arith.constant 0 : index
    %9 = vector.load %arg4[%c0_6, %c0_7] : memref<64x30xbf16, #tpu.memory_space<vmem>>, vector<64x30xbf16>
    %cst_8 = arith.constant dense<0.000000e+00> : vector<8x30xf32>
    %10 = tpu.matmul %8, %9, %cst_8 {dimension_numbers = #tpu.dot_dimension_numbers<[1], [0], [0], [1], [0, 0, 1, 1], [], []>} : vector<8x64xbf16>, vector<64x30xbf16>, vector<8x30xf32> -> vector<8x30xf32>
    %c0_9 = arith.constant 0 : index
    %c0_10 = arith.constant 0 : index
    %11 = vector.load %arg5[%c0_9, %c0_10] : memref<1x30xf32, #tpu.memory_space<vmem>>, vector<1x30xf32>
    %12 = vector.broadcast %11 : vector<1x30xf32> to vector<8x30xf32>
    %13 = arith.addf %10, %12 : vector<8x30xf32>
    %c0_11 = arith.constant 0 : index
    %c0_12 = arith.constant 0 : index
    %14 = vector.load %arg6[%c0_11, %c0_12] : memref<8x30xf32, #tpu.memory_space<vmem>>, vector<8x30xf32>
    tpu.vector_store %arg6[%c0_11, %c0_12], %13 {strides = array<i32>} : memref<8x30xf32, #tpu.memory_space<vmem>>, vector<8x30xf32>,
    return
  }
  func.func @transform_0(%arg0: i32) -> (i32, i32) {
    %c0_i32 = arith.constant 0 : i32
    %c0_i32_0 = arith.constant 0 : i32
    return %arg0, %c0_i32 : i32, i32
  }
  func.func @transform_1(%arg0: i32) -> (i32, i32) {
    %c0_i32 = arith.constant 0 : i32
    %c0_i32_0 = arith.constant 0 : i32
    %c0_i32_1 = arith.constant 0 : i32
    return %c0_i32, %c0_i32_0 : i32, i32
  }
  func.func @transform_2(%arg0: i32) -> (i32, i32) {
    %c0_i32 = arith.constant 0 : i32
    %c0_i32_0 = arith.constant 0 : i32
    %c0_i32_1 = arith.constant 0 : i32
    return %c0_i32, %c0_i32_0 : i32, i32
  }
  func.func @transform_3(%arg0: i32) -> (i32, i32) {
    %c0_i32 = arith.constant 0 : i32
    %c0_i32_0 = arith.constant 0 : i32
    %c0_i32_1 = arith.constant 0 : i32
    return %c0_i32, %c0_i32_0 : i32, i32
  }
  func.func @transform_4(%arg0: i32) -> (i32, i32) {
    %c0_i32 = arith.constant 0 : i32
    %c0_i32_0 = arith.constant 0 : i32
    %c0_i32_1 = arith.constant 0 : i32
    return %c0_i32, %c0_i32_0 : i32, i32
  }
  func.func @transform_5(%arg0: i32) -> (i32, i32) {
    %c0_i32 = arith.constant 0 : i32
    %c0_i32_0 = arith.constant 0 : i32
    return %arg0, %c0_i32 : i32, i32
  }
}

</mosaic_0001>

<llo_original>
// kernel: sub.31
$region0: #{sub.31}
  #allocation0 [shape = 's32[1]{0}', space=sflag, size = 0x4, scoped, tag = 'scoped memory for sub.31']
  %s0 = inlined_call_operand.vmem [shape: f32[6,4,2], index: 0, kind: input, shape index: {}]
  %s1 = inlined_call_operand.vmem [shape: f32[6,4,2], index: 1, kind: input, shape index: {}]
  %s2 = inlined_call_operand.vmem [shape: f32[6,4,2], index: 2, kind: output, shape index: {}]
  %v3 = vld [vmem:[%s0] sm:$0xf]
  %v4 = vld [vmem:[%s1] sm:$0xf]
  %5 = xla_tuple %v3, %v4
  %6 = xla_tuple %5
  %v7 = vsub.f32 %v3, %v4
  %8 = xla_tuple %v7
  %9 = vst [vmem:[%s2] sm:$0xf] %v7
  %s10 = scalar_lea.vmem %s0, 4
  %v11 = vld [vmem:[%s10] sm:$0xf]
  %s12 = scalar_lea.vmem %s1, 4
  %v13 = vld [vmem:[%s12] sm:$0xf]
  %14 = xla_tuple %v11, %v13
  %15 = xla_tuple %14
  %v16 = vsub.f32 %v11, %v13
  %17 = xla_tuple %v16
  %s18 = scalar_lea.vmem %s2, 4
  %19 = vst [vmem:[%s18] sm:$0xf] %v16

// kernel: vae_model_forward.2
$region0: #{vae_model_forward.2}
  #allocation0 [shape = 'u32[]', space=smem, size = 0x4, offset = 0x4, fixed_abs, tag = 'smem constant byte address 0x4 - core index']
  #allocation1 [shape = 'u32[144,128]{1,0:T(1,128)}', space=vmem, size = 0x12000, scoped, tag = 'internal scratch']
  %s0 = inlined_call_operand.vmem [shape: bf16[8,48], index: 0, kind: input, shape index: {}]
  %s1 = inlined_call_operand.vmem [shape: bf16[8,8], index: 1, kind: input, shape index: {}]
  %s2 = inlined_call_operand.vmem [shape: bf16[48,128], index: 2, kind: input, shape index: {}]
  %s3 = inlined_call_operand.vmem [shape: f32[1,128], index: 3, kind: input, shape index: {}]
  %s4 = inlined_call_operand.vmem [shape: bf16[64,16], index: 4, kind: input, shape index: {}]
  %s5 = inlined_call_operand.vmem [shape: f32[1,16], index: 5, kind: input, shape index: {}]
  %s6 = inlined_call_operand.vmem [shape: bf16[8,64], index: 6, kind: input, shape index: {}]
  %s7 = inlined_call_operand.vmem [shape: bf16[64,20], index: 7, kind: input, shape index: {}]
  %s8 = inlined_call_operand.vmem [shape: f32[1,20], index: 8, kind: input, shape index: {}]
  %s9 = inlined_call_operand.vmem [shape: f32[8,21], index: 9, kind: output, shape index: {}]
  %s10 = sld [smem:[#allocation0]]
  $region46: #{vae_model_forward.2} parent=0
    _
  %s12 = ssub.s32 1, %s10
  %s13 = scalar_select 0, %s12, %s10
  // Predicated region
  $region2: #{vae_model_forward.2} parent=0 // pred_check
    _
  $region3: #{vae_model_forward.2} parent=0 // pred_check_branch
    %15 = sbr.rel (0) target = $region5
  $region4: #{vae_model_forward.2} parent=0 // pred_region
    _
  $region5: #{vae_model_forward.2} parent=0 // pred_fallthru
    _
  // Predicated region
  $region6: #{vae_model_forward.2} parent=0 // pred_check
    _
  $region7: #{vae_model_forward.2} parent=0 // pred_check_branch
    %17 = sbr.rel (0) target = $region9
  $region8: #{vae_model_forward.2} parent=0 // pred_region
    _
  $region9: #{vae_model_forward.2} parent=0 // pred_fallthru
    _
  // Predicated region
  $region10: #{vae_model_forward.2} parent=0 // pred_check
    _
  $region11: #{vae_model_forward.2} parent=0 // pred_check_branch
    %19 = sbr.rel (0) target = $region13
  $region12: #{vae_model_forward.2} parent=0 // pred_region
    _
  $region13: #{vae_model_forward.2} parent=0 // pred_fallthru
    _
  // Predicated region
  $region14: #{vae_model_forward.2} parent=0 // pred_check
    _
  $region15: #{vae_model_forward.2} parent=0 // pred_check_branch
    %21 = sbr.rel (0) target = $region17
  $region16: #{vae_model_forward.2} parent=0 // pred_region
    _
  $region17: #{vae_model_forward.2} parent=0 // pred_fallthru
    _
  // Predicated region
  $region18: #{vae_model_forward.2} parent=0 // pred_check
    _
  $region19: #{vae_model_forward.2} parent=0 // pred_check_branch
    %23 = sbr.rel (0) target = $region21
  $region20: #{vae_model_forward.2} parent=0 // pred_region
    _
  $region21: #{vae_model_forward.2} parent=0 // pred_fallthru
    _
  // Predicated region
  $region22: #{vae_model_forward.2} parent=0 // pred_check
    _
  $region23: #{vae_model_forward.2} parent=0 // pred_check_branch
    %25 = sbr.rel (0) target = $region25
  $region24: #{vae_model_forward.2} parent=0 // pred_region
    _
  $region25: #{vae_model_forward.2} parent=0 // pred_fallthru
    _
  // Predicated region
  $region26: #{vae_model_forward.2} parent=0 // pred_check
    _
  $region27: #{vae_model_forward.2} parent=0 // pred_check_branch
    %27 = sbr.rel (0) target = $region29
  $region28: #{vae_model_forward.2} parent=0 // pred_region
    _
  $region29: #{vae_model_forward.2} parent=0 // pred_fallthru
    _
  // Predicated region
  $region30: #{vae_model_forward.2} parent=0 // pred_check
    _
  $region31: #{vae_model_forward.2} parent=0 // pred_check_branch
    %29 = sbr.rel (0) target = $region33
  $region32: #{vae_model_forward.2} parent=0 // pred_region
    _
  $region33: #{vae_model_forward.2} parent=0 // pred_fallthru
    _
  // Predicated region
  $region34: #{vae_model_forward.2} parent=0 // pred_check
    _
  $region35: #{vae_model_forward.2} parent=0 // pred_check_branch
    %31 = sbr.rel (0) target = $region37
  $region36: #{vae_model_forward.2} parent=0 // pred_region
    _
  $region37: #{vae_model_forward.2} parent=0 // pred_fallthru
    _
  %v33 = vld [vmem:[%s0] sm:$0xf]
  %v34 = vld [vmem:[%s2] sm:$0xf]
  %v35 = vld [vmem:[%s2 + $0x4] sm:$0xf]
  %v36 = vld [vmem:[%s2 + $0x8] sm:$0xf]
  %v37 = vld [vmem:[%s2 + $0xc] sm:$0xf]
  %v38 = vld [vmem:[%s2 + $0x10] sm:$0xf]
  %v39 = vld [vmem:[%s2 + $0x14] sm:$0xf]
  %v40 = vld [vmem:[%s3] sm:$0x1]
  %v42 = vlaneseq
  %v43 = vshrl.u32 %v42, 7
  %v44 = vsub.s32 0, %v43
  %v45 = vrot.slane %v40, %v44
  %v53 = vunpack.c.l.b16 %v34
  %v54 = vunpack.c.l.b16 %v35
  %v55 = vunpack.c.l.b16 %v36
  %v56 = vunpack.c.l.b16 %v37
  %v57 = vunpack.c.l.b16 %v38
  %v58 = vunpack.c.l.b16 %v39
  %v59 = vpack.c.b16 %v54, %v53
  %v60 = vpack.c.b16 %v56, %v55
  %v61 = vpack.c.b16 %v58, %v57
  %vm65 = vcmask 392192
  %v67 = vsel %vm65, %v33, 0
  %69 = vmatprep.subr.bf16.mxu0 0
  %70 = vmatpush1.bf16.msra.mxu0 0
  %71 = vmatprep.subr.bf16.mxu0 0
  %72 = vmatpush1.bf16.msra.mxu0 0
  %73 = vmatprep.subr.bf16.mxu0 0
  %74 = vmatpush1.bf16.msra.mxu0 0
  %75 = vmatprep.subr.bf16.mxu0 0
  %76 = vmatpush1.bf16.msra.mxu0 0
  %77 = vmatprep.subr.bf16.mxu0 0
  %78 = vmatpush1.bf16.msra.mxu0 0
  %79 = vmatprep.subr.bf16.mxu0 0
  %80 = vmatpush1.bf16.msra.mxu0 %v61
  %81 = vmatprep.subr.bf16.mxu0 0
  %82 = vmatpush1.bf16.msra.mxu0 %v60
  %83 = vmatprep.subr.bf16.mxu0 0
  %84 = vmatpush1.bf16.msra.mxu0 %v59
  %85 = vmatprep.subr.bf16.mxu0 0
  %86 = vmatpush2.bf16.msra.mxu0 0
  %87 = vmatprep.subr.bf16.mxu0 0
  %88 = vmatpush2.bf16.msra.mxu0 0
  %89 = vmatprep.subr.bf16.mxu0 0
  %90 = vmatpush2.bf16.msra.mxu0 0
  %91 = vmatprep.subr.bf16.mxu0 0
  %92 = vmatpush2.bf16.msra.mxu0 0
  %93 = vmatprep.subr.bf16.mxu0 0
  %94 = vmatpush2.bf16.msra.mxu0 0
  %95 = vmatprep.subr.bf16.mxu0 0
  %96 = vmatpush2.bf16.msra.mxu0 0
  %97 = vmatprep.subr.bf16.mxu0 0
  %98 = vmatpush2.bf16.msra.mxu0 0
  %99 = vmatprep.subr.bf16.mxu0 0
  %100 = vmatpush2.bf16.msra.mxu0 0
  %101 = vmatprep.mubr.bf16.mxu0 0
  %102 = vmatmul.mubr.bf16.gmra.mxu0 %v67
  %v103 = vpop.f32.mrf.mxu0
  %v104 = vadd.f32 %v45, %v103
  %v105 = vpop.f32.mrf.mxu0
  %v106 = vpop.f32.mrf.mxu0
  %v107 = vpop.f32.mrf.mxu0
  %108 = vdwg.mxu0
  %v109 = vmax.f32 %v104, 0.0
  %v110 = vpack.c.bf16 %v109, %v109
  %v111 = vld [vmem:[%s4] sm:$0xf]
  %v112 = vld [vmem:[%s4 + $0x4] sm:$0xf]
  %v113 = vld [vmem:[%s4 + $0x8] sm:$0xf]
  %v114 = vld [vmem:[%s4 + $0xc] sm:$0xf]
  %v115 = vld [vmem:[%s4 + $0x10] sm:$0xf]
  %v116 = vld [vmem:[%s4 + $0x14] sm:$0xf]
  %v117 = vld [vmem:[%s4 + $0x18] sm:$0xf]
  %v118 = vld [vmem:[%s4 + $0x1c] sm:$0xf]
  %v119 = vld [vmem:[%s5] sm:$0x1]
  %v121 = vlaneseq
  %v122 = vshrl.u32 %v121, 7
  %v123 = vsub.s32 0, %v122
  %v124 = vrot.slane %v119, %v123
  %v134 = vunpack.c.l.b16 %v111
  %v135 = vunpack.c.l.b16 %v112
  %v136 = vunpack.c.l.b16 %v113
  %v137 = vunpack.c.l.b16 %v114
  %v138 = vunpack.c.l.b16 %v115
  %v139 = vunpack.c.l.b16 %v116
  %v140 = vunpack.c.l.b16 %v117
  %v141 = vunpack.c.l.b16 %v118
  %v142 = vpack.c.b16 %v135, %v134
  %v143 = vpack.c.b16 %v137, %v136
  %v144 = vpack.c.b16 %v139, %v138
  %v145 = vpack.c.b16 %v141, %v140
  %vm150 = vcmask 523264
  %v152 = vsel %vm150, %v110, 0
  %154 = vmatprep.subr.bf16.mxu0 0
  %155 = vmatpush1.bf16.msra.mxu0 0
  %156 = vmatprep.subr.bf16.mxu0 0
  %157 = vmatpush1.bf16.msra.mxu0 0
  %158 = vmatprep.subr.bf16.mxu0 0
  %159 = vmatpush1.bf16.msra.mxu0 0
  %160 = vmatprep.subr.bf16.mxu0 0
  %161 = vmatpush1.bf16.msra.mxu0 0
  %162 = vmatprep.subr.bf16.mxu0 0
  %163 = vmatpush1.bf16.msra.mxu0 %v145
  %164 = vmatprep.subr.bf16.mxu0 0
  %165 = vmatpush1.bf16.msra.mxu0 %v144
  %166 = vmatprep.subr.bf16.mxu0 0
  %167 = vmatpush1.bf16.msra.mxu0 %v143
  %168 = vmatprep.subr.bf16.mxu0 0
  %169 = vmatpush1.bf16.msra.mxu0 %v142
  %170 = vmatprep.subr.bf16.mxu0 0
  %171 = vmatpush2.bf16.msra.mxu0 0
  %172 = vmatprep.subr.bf16.mxu0 0
  %173 = vmatpush2.bf16.msra.mxu0 0
  %174 = vmatprep.subr.bf16.mxu0 0
  %175 = vmatpush2.bf16.msra.mxu0 0
  %176 = vmatprep.subr.bf16.mxu0 0
  %177 = vmatpush2.bf16.msra.mxu0 0
  %178 = vmatprep.subr.bf16.mxu0 0
  %179 = vmatpush2.bf16.msra.mxu0 0
  %180 = vmatprep.subr.bf16.mxu0 0
  %181 = vmatpush2.bf16.msra.mxu0 0
  %182 = vmatprep.subr.bf16.mxu0 0
  %183 = vmatpush2.bf16.msra.mxu0 0
  %184 = vmatprep.subr.bf16.mxu0 0
  %185 = vmatpush2.bf16.msra.mxu0 0
  %186 = vmatprep.mubr.bf16.mxu0 0
  %187 = vmatmul.mubr.bf16.gmra.mxu0 %v152
  %v188 = vpop.f32.mrf.mxu0
  %v189 = vadd.f32 %v124, %v188
  %v190 = vpop.f32.mrf.mxu0
  %v191 = vpop.f32.mrf.mxu0
  %v192 = vpop.f32.mrf.mxu0
  %193 = vdwg.mxu0
  %v194 = vld [vmem:[%s1] sm:$0xf]
  %v195 = vunpack.c.l.bf16 %v194
  %v196 = vmul.f32 %v189, 0.5
  %v197 = vmul.f32 %v196, 1.442695
  %v198 = vpow.pop %v197
  %200 = vrot.lane.b32.xlu0 %v198, 120
  %v201 = vpop.permute.xlu0 %200
  %v203 = vmul.f32 %v195, %v201
  %v204 = vadd.f32 %v189, %v203
  %v205 = vpack.c.bf16 %v204, %v204
  %v206 = vld [vmem:[%s6] sm:$0xf]
  %208 = vrot.lane.b32.xlu0 %v104, 64
  %v209 = vpop.permute.xlu0 %208
  %vm211 = vcmask 64512
  %v213 = vsel %vm211, %v205, 0
  %vm215 = vcmask 1043456
  %v217 = vsel %vm215, %v206, 0
  %219 = vmatprep.subr.bf16.mxu0 0
  %220 = vmatpush1.bf16.msra.mxu0 0
  %221 = vmatprep.subr.bf16.mxu0 0
  %222 = vmatpush1.bf16.msra.mxu0 0
  %223 = vmatprep.subr.bf16.mxu0 0
  %224 = vmatpush1.bf16.msra.mxu0 0
  %225 = vmatprep.subr.bf16.mxu0 0
  %226 = vmatpush1.bf16.msra.mxu0 0
  %227 = vmatprep.subr.bf16.mxu0 0
  %228 = vmatpush1.bf16.msra.mxu0 0
  %229 = vmatprep.subr.bf16.mxu0 0
  %230 = vmatpush1.bf16.msra.mxu0 0
  %231 = vmatprep.subr.bf16.mxu0 0
  %232 = vmatpush1.bf16.msra.mxu0 0
  %233 = vmatprep.subr.bf16.mxu0 0
  %234 = vmatpush1.bf16.msra.mxu0 %v217
  %235 = vmatprep.subr.bf16.mxu0 0
  %236 = vmatpush2.bf16.msra.mxu0 0
  %237 = vmatprep.subr.bf16.mxu0 0
  %238 = vmatpush2.bf16.msra.mxu0 0
  %239 = vmatprep.subr.bf16.mxu0 0
  %240 = vmatpush2.bf16.msra.mxu0 0
  %241 = vmatprep.subr.bf16.mxu0 0
  %242 = vmatpush2.bf16.msra.mxu0 0
  %243 = vmatprep.subr.bf16.mxu0 0
  %244 = vmatpush2.bf16.msra.mxu0 0
  %245 = vmatprep.subr.bf16.mxu0 0
  %246 = vmatpush2.bf16.msra.mxu0 0
  %247 = vmatprep.subr.bf16.mxu0 0
  %248 = vmatpush2.bf16.msra.mxu0 0
  %249 = vmatprep.subr.bf16.mxu0 0
  %250 = vmatpush2.bf16.msra.mxu0 0
  %251 = vmatprep.mubr.bf16.mxu0 0
  %252 = vmatmul.mubr.bf16.gmra.mxu0 %v213
  %v253 = vpop.f32.mrf.mxu0
  %v254 = vadd.f32 %v209, %v253
  %v255 = vpop.f32.mrf.mxu0
  %v256 = vpop.f32.mrf.mxu0
  %v257 = vpop.f32.mrf.mxu0
  %258 = vdwg.mxu0
  %v259 = vmax.f32 %v254, 0.0
  %v260 = vpack.c.bf16 %v259, %v259
  %v261 = vld [vmem:[%s7] sm:$0xf]
  %v262 = vld [vmem:[%s7 + $0x4] sm:$0xf]
  %v263 = vld [vmem:[%s7 + $0x8] sm:$0xf]
  %v264 = vld [vmem:[%s7 + $0xc] sm:$0xf]
  %v265 = vld [vmem:[%s7 + $0x10] sm:$0xf]
  %v266 = vld [vmem:[%s7 + $0x14] sm:$0xf]
  %v267 = vld [vmem:[%s7 + $0x18] sm:$0xf]
  %v268 = vld [vmem:[%s7 + $0x1c] sm:$0xf]
  %v269 = vld [vmem:[%s8] sm:$0x1]
  %v271 = vlaneseq
  %v272 = vshrl.u32 %v271, 7
  %v273 = vsub.s32 0, %v272
  %v274 = vrot.slane %v269, %v273
  %v284 = vunpack.c.l.b16 %v261
  %v285 = vunpack.c.l.b16 %v262
  %v286 = vunpack.c.l.b16 %v263
  %v287 = vunpack.c.l.b16 %v264
  %v288 = vunpack.c.l.b16 %v265
  %v289 = vunpack.c.l.b16 %v266
  %v290 = vunpack.c.l.b16 %v267
  %v291 = vunpack.c.l.b16 %v268
  %v292 = vpack.c.b16 %v285, %v284
  %v293 = vpack.c.b16 %v287, %v286
  %v294 = vpack.c.b16 %v289, %v288
  %v295 = vpack.c.b16 %v291, %v290
  %v301 = vsel %vm150, %v260, 0
  %303 = vmatprep.subr.bf16.mxu0 0
  %304 = vmatpush1.bf16.msra.mxu0 0
  %305 = vmatprep.subr.bf16.mxu0 0
  %306 = vmatpush1.bf16.msra.mxu0 0
  %307 = vmatprep.subr.bf16.mxu0 0
  %308 = vmatpush1.bf16.msra.mxu0 0
  %309 = vmatprep.subr.bf16.mxu0 0
  %310 = vmatpush1.bf16.msra.mxu0 0
  %311 = vmatprep.subr.bf16.mxu0 0
  %312 = vmatpush1.bf16.msra.mxu0 %v295
  %313 = vmatprep.subr.bf16.mxu0 0
  %314 = vmatpush1.bf16.msra.mxu0 %v294
  %315 = vmatprep.subr.bf16.mxu0 0
  %316 = vmatpush1.bf16.msra.mxu0 %v293
  %317 = vmatprep.subr.bf16.mxu0 0
  %318 = vmatpush1.bf16.msra.mxu0 %v292
  %319 = vmatprep.subr.bf16.mxu0 0
  %320 = vmatpush2.bf16.msra.mxu0 0
  %321 = vmatprep.subr.bf16.mxu0 0
  %322 = vmatpush2.bf16.msra.mxu0 0
  %323 = vmatprep.subr.bf16.mxu0 0
  %324 = vmatpush2.bf16.msra.mxu0 0
  %325 = vmatprep.subr.bf16.mxu0 0
  %326 = vmatpush2.bf16.msra.mxu0 0
  %327 = vmatprep.subr.bf16.mxu0 0
  %328 = vmatpush2.bf16.msra.mxu0 0
  %329 = vmatprep.subr.bf16.mxu0 0
  %330 = vmatpush2.bf16.msra.mxu0 0
  %331 = vmatprep.subr.bf16.mxu0 0
  %332 = vmatpush2.bf16.msra.mxu0 0
  %333 = vmatprep.subr.bf16.mxu0 0
  %334 = vmatpush2.bf16.msra.mxu0 0
  %335 = vmatprep.mubr.bf16.mxu0 0
  %336 = vmatmul.mubr.bf16.gmra.mxu0 %v301
  %v337 = vpop.f32.mrf.mxu0
  %v338 = vadd.f32 %v274, %v337
  %v339 = vpop.f32.mrf.mxu0
  %v340 = vpop.f32.mrf.mxu0
  %v341 = vpop.f32.mrf.mxu0
  %342 = vdwg.mxu0
  %v343 = vmul.f32 %v189, 1.442695
  %v344 = vpow.pop %v343
  %v345 = vmul.f32 %v189, %v189
  %347 = vrot.lane.b32.xlu0 %v345, 8
  %v348 = vpop.permute.xlu0 %347
  %v350 = vadd.f32 %v344, %v348
  %v351 = vsub.f32 %v350, %v189
  %v352 = vsub.f32 %v351, 1.0
  %354 = vrot.lane.b32.xlu0 %v352, 120
  %v355 = vpop.permute.xlu0 %354
  %v357 = vsel %vm211, %v355, 0.0
  %358 = vadd.xlane.f32.xlu0 %v357
  %v359 = vpop.xlane.xlu0 %358
  %v360 = vmul.f32 %v359, 0.5
  %vm361 = vcmask 162816
  %v362 = vsel %vm361, %v338, %v360
  %vm363 = vcmask 171008
  %364 = vst.msk [vmem:[%s9] sm:$0xff] %vm363, %v362
  // Predicated region
  $region38: #{vae_model_forward.2} parent=0 // pred_check
    _
  $region39: #{vae_model_forward.2} parent=0 // pred_check_branch
    %366 = sbr.rel (0) target = $region41
  $region40: #{vae_model_forward.2} parent=0 // pred_region
    _
  $region41: #{vae_model_forward.2} parent=0 // pred_fallthru
    _
  // Predicated region
  $region42: #{vae_model_forward.2} parent=0 // pred_check
    _
  $region43: #{vae_model_forward.2} parent=0 // pred_check_branch
    %368 = sbr.rel (0) target = $region45
  $region44: #{vae_model_forward.2} parent=0 // pred_region
    _
  $region45: #{vae_model_forward.2} parent=0 // pred_fallthru
    _

// kernel: vae_model_forward.3
$region0: #{vae_model_forward.3}
  #allocation0 [shape = 'u32[]', space=smem, size = 0x4, offset = 0x4, fixed_abs, tag = 'smem constant byte address 0x4 - core index']
  #allocation1 [shape = 'u32[144,128]{1,0:T(1,128)}', space=vmem, size = 0x12000, scoped, tag = 'internal scratch']
  %s0 = inlined_call_operand.vmem [shape: bf16[8,48], index: 0, kind: input, shape index: {}]
  %s1 = inlined_call_operand.vmem [shape: bf16[48,64], index: 1, kind: input, shape index: {}]
  %s2 = inlined_call_operand.vmem [shape: f32[1,64], index: 2, kind: input, shape index: {}]
  %s3 = inlined_call_operand.vmem [shape: bf16[64,30], index: 3, kind: input, shape index: {}]
  %s4 = inlined_call_operand.vmem [shape: f32[1,30], index: 4, kind: input, shape index: {}]
  %s5 = inlined_call_operand.hbm [shape: f32[8,30], index: 5, kind: output, shape index: {}]
  %s6 = sld [smem:[#allocation0]]
  $region30: #{vae_model_forward.3} parent=0
    _
  %s8 = ssub.s32 1, %s6
  %s9 = scalar_select 0, %s8, %s6
  $region1: #{vae_model_forward.3} parent=0
    #allocation2 [shape = 'u8[4096]{0}', space=vmem, size = 0x1000, scoped, tag = 'output window, operand 0, single buffered']
    #allocation3 [shape = 's32[1]{0}', space=sflag, size = 0x4, scoped, tag = 'scoped memory for vae_model_forward.3']
    %10 = vsyncpa [#allocation3], 0
    // Predicated region
    $region2: #{vae_model_forward.3} parent=1 // pred_check
      _
    $region3: #{vae_model_forward.3} parent=1 // pred_check_branch
      %12 = sbr.rel (0) target = $region5
    $region4: #{vae_model_forward.3} parent=1 // pred_region
      _
    $region5: #{vae_model_forward.3} parent=1 // pred_fallthru
      _
    // Predicated region
    $region6: #{vae_model_forward.3} parent=1 // pred_check
      _
    $region7: #{vae_model_forward.3} parent=1 // pred_check_branch
      %14 = sbr.rel (0) target = $region9
    $region8: #{vae_model_forward.3} parent=1 // pred_region
      _
    $region9: #{vae_model_forward.3} parent=1 // pred_fallthru
      _
    // Predicated region
    $region10: #{vae_model_forward.3} parent=1 // pred_check
      _
    $region11: #{vae_model_forward.3} parent=1 // pred_check_branch
      %16 = sbr.rel (0) target = $region13
    $region12: #{vae_model_forward.3} parent=1 // pred_region
      _
    $region13: #{vae_model_forward.3} parent=1 // pred_fallthru
      _
    // Predicated region
    $region14: #{vae_model_forward.3} parent=1 // pred_check
      _
    $region15: #{vae_model_forward.3} parent=1 // pred_check_branch
      %18 = sbr.rel (0) target = $region17
    $region16: #{vae_model_forward.3} parent=1 // pred_region
      _
    $region17: #{vae_model_forward.3} parent=1 // pred_fallthru
      _
    // Predicated region
    $region18: #{vae_model_forward.3} parent=1 // pred_check
      _
    $region19: #{vae_model_forward.3} parent=1 // pred_check_branch
      %20 = sbr.rel (0) target = $region21
    $region20: #{vae_model_forward.3} parent=1 // pred_region
      _
    $region21: #{vae_model_forward.3} parent=1 // pred_fallthru
      _
    %v22 = vld [vmem:[%s0] sm:$0xf]
    %v23 = vld [vmem:[%s1] sm:$0xf]
    %v24 = vld [vmem:[%s1 + $0x4] sm:$0xf]
    %v25 = vld [vmem:[%s1 + $0x8] sm:$0xf]
    %v26 = vld [vmem:[%s1 + $0xc] sm:$0xf]
    %v27 = vld [vmem:[%s1 + $0x10] sm:$0xf]
    %v28 = vld [vmem:[%s1 + $0x14] sm:$0xf]
    %v29 = vld [vmem:[%s2] sm:$0x1]
    %v31 = vlaneseq
    %v32 = vshrl.u32 %v31, 7
    %v33 = vsub.s32 0, %v32
    %v34 = vrot.slane %v29, %v33
    %v42 = vunpack.c.l.b16 %v23
    %v43 = vunpack.c.l.b16 %v24
    %v44 = vunpack.c.l.b16 %v25
    %v45 = vunpack.c.l.b16 %v26
    %v46 = vunpack.c.l.b16 %v27
    %v47 = vunpack.c.l.b16 %v28
    %v48 = vpack.c.b16 %v43, %v42
    %v49 = vpack.c.b16 %v45, %v44
    %v50 = vpack.c.b16 %v47, %v46
    %vm54 = vcmask 392192
    %v56 = vsel %vm54, %v22, 0
    %58 = vmatprep.subr.bf16.mxu0 0
    %59 = vmatpush1.bf16.msra.mxu0 0
    %60 = vmatprep.subr.bf16.mxu0 0
    %61 = vmatpush1.bf16.msra.mxu0 0
    %62 = vmatprep.subr.bf16.mxu0 0
    %63 = vmatpush1.bf16.msra.mxu0 0
    %64 = vmatprep.subr.bf16.mxu0 0
    %65 = vmatpush1.bf16.msra.mxu0 0
    %66 = vmatprep.subr.bf16.mxu0 0
    %67 = vmatpush1.bf16.msra.mxu0 0
    %68 = vmatprep.subr.bf16.mxu0 0
    %69 = vmatpush1.bf16.msra.mxu0 %v50
    %70 = vmatprep.subr.bf16.mxu0 0
    %71 = vmatpush1.bf16.msra.mxu0 %v49
    %72 = vmatprep.subr.bf16.mxu0 0
    %73 = vmatpush1.bf16.msra.mxu0 %v48
    %74 = vmatprep.subr.bf16.mxu0 0
    %75 = vmatpush2.bf16.msra.mxu0 0
    %76 = vmatprep.subr.bf16.mxu0 0
    %77 = vmatpush2.bf16.msra.mxu0 0
    %78 = vmatprep.subr.bf16.mxu0 0
    %79 = vmatpush2.bf16.msra.mxu0 0
    %80 = vmatprep.subr.bf16.mxu0 0
    %81 = vmatpush2.bf16.msra.mxu0 0
    %82 = vmatprep.subr.bf16.mxu0 0
    %83 = vmatpush2.bf16.msra.mxu0 0
    %84 = vmatprep.subr.bf16.mxu0 0
    %85 = vmatpush2.bf16.msra.mxu0 0
    %86 = vmatprep.subr.bf16.mxu0 0
    %87 = vmatpush2.bf16.msra.mxu0 0
    %88 = vmatprep.subr.bf16.mxu0 0
    %89 = vmatpush2.bf16.msra.mxu0 0
    %90 = vmatprep.mubr.bf16.mxu0 0
    %91 = vmatmul.mubr.bf16.gmra.mxu0 %v56
    %v92 = vpop.f32.mrf.mxu0
    %v93 = vadd.f32 %v34, %v92
    %v94 = vpop.f32.mrf.mxu0
    %v95 = vpop.f32.mrf.mxu0
    %v96 = vpop.f32.mrf.mxu0
    %97 = vdwg.mxu0
    %v98 = vmax.f32 %v93, 0.0
    %v99 = vpack.c.bf16 %v98, %v98
    %v100 = vld [vmem:[%s3] sm:$0xf]
    %v101 = vld [vmem:[%s3 + $0x4] sm:$0xf]
    %v102 = vld [vmem:[%s3 + $0x8] sm:$0xf]
    %v103 = vld [vmem:[%s3 + $0xc] sm:$0xf]
    %v104 = vld [vmem:[%s3 + $0x10] sm:$0xf]
    %v105 = vld [vmem:[%s3 + $0x14] sm:$0xf]
    %v106 = vld [vmem:[%s3 + $0x18] sm:$0xf]
    %v107 = vld [vmem:[%s3 + $0x1c] sm:$0xf]
    %v108 = vld [vmem:[%s4] sm:$0x1]
    %v110 = vlaneseq
    %v111 = vshrl.u32 %v110, 7
    %v112 = vsub.s32 0, %v111
    %v113 = vrot.slane %v108, %v112
    %v123 = vunpack.c.l.b16 %v100
    %v124 = vunpack.c.l.b16 %v101
    %v125 = vunpack.c.l.b16 %v102
    %v126 = vunpack.c.l.b16 %v103
    %v127 = vunpack.c.l.b16 %v104
    %v128 = vunpack.c.l.b16 %v105
    %v129 = vunpack.c.l.b16 %v106
    %v130 = vunpack.c.l.b16 %v107
    %v131 = vpack.c.b16 %v124, %v123
    %v132 = vpack.c.b16 %v126, %v125
    %v133 = vpack.c.b16 %v128, %v127
    %v134 = vpack.c.b16 %v130, %v129
    %vm139 = vcmask 523264
    %v141 = vsel %vm139, %v99, 0
    %143 = vmatprep.subr.bf16.mxu0 0
    %144 = vmatpush1.bf16.msra.mxu0 0
    %145 = vmatprep.subr.bf16.mxu0 0
    %146 = vmatpush1.bf16.msra.mxu0 0
    %147 = vmatprep.subr.bf16.mxu0 0
    %148 = vmatpush1.bf16.msra.mxu0 0
    %149 = vmatprep.subr.bf16.mxu0 0
    %150 = vmatpush1.bf16.msra.mxu0 0
    %151 = vmatprep.subr.bf16.mxu0 0
    %152 = vmatpush1.bf16.msra.mxu0 %v134
    %153 = vmatprep.subr.bf16.mxu0 0
    %154 = vmatpush1.bf16.msra.mxu0 %v133
    %155 = vmatprep.subr.bf16.mxu0 0
    %156 = vmatpush1.bf16.msra.mxu0 %v132
    %157 = vmatprep.subr.bf16.mxu0 0
    %158 = vmatpush1.bf16.msra.mxu0 %v131
    %159 = vmatprep.subr.bf16.mxu0 0
    %160 = vmatpush2.bf16.msra.mxu0 0
    %161 = vmatprep.subr.bf16.mxu0 0
    %162 = vmatpush2.bf16.msra.mxu0 0
    %163 = vmatprep.subr.bf16.mxu0 0
    %164 = vmatpush2.bf16.msra.mxu0 0
    %165 = vmatprep.subr.bf16.mxu0 0
    %166 = vmatpush2.bf16.msra.mxu0 0
    %167 = vmatprep.subr.bf16.mxu0 0
    %168 = vmatpush2.bf16.msra.mxu0 0
    %169 = vmatprep.subr.bf16.mxu0 0
    %170 = vmatpush2.bf16.msra.mxu0 0
    %171 = vmatprep.subr.bf16.mxu0 0
    %172 = vmatpush2.bf16.msra.mxu0 0
    %173 = vmatprep.subr.bf16.mxu0 0
    %174 = vmatpush2.bf16.msra.mxu0 0
    %175 = vmatprep.mubr.bf16.mxu0 0
    %176 = vmatmul.mubr.bf16.gmra.mxu0 %v141
    %v177 = vpop.f32.mrf.mxu0
    %v178 = vadd.f32 %v113, %v177
    %v179 = vpop.f32.mrf.mxu0
    %v180 = vpop.f32.mrf.mxu0
    %v181 = vpop.f32.mrf.mxu0
    %182 = vdwg.mxu0
    %vm183 = vcmask 244736
    %184 = vst.msk [vmem:[#allocation2] sm:$0xff] %vm183, %v178
    // Predicated region
    $region22: #{vae_model_forward.3} parent=1 // pred_check
      _
    $region23: #{vae_model_forward.3} parent=1 // pred_check_branch
      %186 = sbr.rel (0) target = $region25
    $region24: #{vae_model_forward.3} parent=1 // pred_region
      %s188 = ssub.s32 128, 128
      %189 = vsyncadd [#allocation3], %s188
      %s191 = sshll.u32 [#allocation2], 4
      %s192 = int_to_ptr.vmem [resolvable:$true] %s191
      %194 = dma.vmem_to_hbm [thread:$0]  %s192, 128, %s5, [#allocation3]
    $region25: #{vae_model_forward.3} parent=1 // pred_fallthru
      _
    // Predicated region
    $region26: #{vae_model_forward.3} parent=1 // pred_check
      _
    $region27: #{vae_model_forward.3} parent=1 // pred_check_branch
      %196 = sbr.rel (0) target = $region29
    $region28: #{vae_model_forward.3} parent=1 // pred_region
      %197 = dma.done [#allocation3], 128
    $region29: #{vae_model_forward.3} parent=1 // pred_fallthru
      _
    %198 = vsyncpa [#allocation3], 1

</llo_original>
